<compile_context>
chip_gen: v7x
topology: tpu7x:2x2x1
jax: 0.10.0
libtpu: 0.0.40
codegen_flags: <defaults>
</compile_context>

<pallas_src>
import jax
import jax.numpy as jnp
from jax.experimental import pallas as pl
from jax.experimental.pallas import tpu as pltpu


# Finite "-inf" floor: avoids exp(-inf - (-inf)) = NaN in the online update while
# still underflowing to exactly 0 in the final cross-lane combine.
_NEG_LARGE = -0.5 * float(jnp.finfo(jnp.float32).max)


def _round_up(x, m):
    return ((x + m - 1) // m) * m


def _vmem_capacity_bytes():
    """Best-effort per-generation VMEM query; conservative v7x (64 MiB) fallback."""
    cap = 64 * 1024 * 1024
    try:
        info = pltpu.get_tpu_info()
        queried = int(getattr(info, "vmem_capacity_bytes", cap))
        if queried >= 16 * 1024 * 1024:
            cap = queried
    except Exception:
        pass
    return cap


def _largest_tile(bp, cap):
    """Largest multiple of 128 that divides bp and is <= cap."""
    best = 128
    for m in range(128, min(bp, cap) + 1, 128):
        if bp % m == 0:
            best = m
    return best


def _footprint_bytes(tq, tk, d, itemsize):
    # double-buffered q + c blocks, (tq,128) f32 m/l scratch, s tile + exp temps,
    # bias block.
    return ((2 * tq + 2 * tk) * d * itemsize
            + 2 * tq * 128 * 4
            + 3 * tq * tk * 4
            + 2 * tk * 4)


def _choose_tiles(bp, d, itemsize, budget):
    """Pick (tq, tk): large tq for c-tile reuse (AI ~ 2*tq/itemsize flops/byte),
    but keep num_q >= 2 when bp >= 256 so both v7x TensorCores get row tiles."""
    cap_q_pref = 1024 if itemsize <= 2 else 512
    for cap_q, cap_k in ((cap_q_pref, 512), (512, 512), (512, 256),
                         (256, 256), (256, 128), (128, 128)):
        cap_q = min(cap_q, max(128, bp // 2))
        tq = _largest_tile(bp, cap_q)
        tk = _largest_tile(bp, cap_k)
        if _footprint_bytes(tq, tk, d, itemsize) <= budget:
            return tq, tk
    return 128, 128


def _make_kernel(tq, tk, num_k, use_bias):
    """Flash-style logsumexp kernel body (static config baked in)."""
    n_chunks = tk // 128

    def body(q_ref, c_ref, bias_ref, lse_ref, m_scr, l_scr):
        # NOTE: pl.program_id is only called here, at the top level of the body
        # (never inside pl.when closures) -- required for the interpret path.
        k = pl.program_id(1)

        @pl.when(k == 0)
        def _init():
            m_scr[...] = jnp.full(m_scr.shape, _NEG_LARGE, dtype=jnp.float32)
            l_scr[...] = jnp.zeros(l_scr.shape, dtype=jnp.float32)

        # scores tile (tq, tk): MXU, f32 accumulation, no transpose of c.
        s = jax.lax.dot_general(
            q_ref[...], c_ref[...],
            dimension_numbers=(((1,), (1,)), ((), ())),
            preferred_element_type=jnp.float32)
        if use_bias:
            # (1, tk) additive mask: 0 for valid columns, _NEG_LARGE for padded.
            s = s + bias_ref[...]

        # Per-lane online logsumexp: all VPU max/add + EUP exp, no XLU per step.
        m_prev = m_scr[...]
        m_new = m_prev
        for b in range(n_chunks):
            m_new = jnp.maximum(m_new, s[:, b * 128:(b + 1) * 128])
        l_new = jnp.exp(m_prev - m_new) * l_scr[...]
        for b in range(n_chunks):
            l_new = l_new + jnp.exp(s[:, b * 128:(b + 1) * 128] - m_new)
        m_scr[...] = m_new
        l_scr[...] = l_new

        @pl.when(k == num_k - 1)
        def _finalize():
            # Single cross-lane combine per row tile (XLU), f32.
            m_lane = m_scr[...]
            m_row = jnp.max(m_lane, axis=-1, keepdims=True)            # (tq, 1)
            l_row = jnp.sum(jnp.exp(m_lane - m_row) * l_scr[...],
                            axis=-1, keepdims=True)                    # (tq, 1)
            lse_ref[...] = m_row + jnp.log(l_row)

    if use_bias:
        return body

    def body_nobias(q_ref, c_ref, lse_ref, m_scr, l_scr):
        return body(q_ref, c_ref, None, lse_ref, m_scr, l_scr)

    return body_nobias


def encoders_loss(encoded_q, encoded_c, *, matmul_dtype=jnp.bfloat16):
    """Pallas equivalent of EncodersLoss.forward; returns a scalar f32.

    matmul_dtype: dtype of the MXU inputs (bf16 by default; pass jnp.float32 or
    None to keep the input dtype). Accumulation is always f32, and the target
    logit (diagonal) is always computed exactly in f32 in the wrapper.
    """
    B, D = encoded_q.shape
    assert encoded_c.shape == (B, D)

    qf = encoded_q.astype(jnp.float32)
    cf = encoded_c.astype(jnp.float32)
    # Exact f32 target logit scores[i, i] = <q_i, c_i>; subtracted outside the
    # kernel (trivial O(B*D) XLA op), so no third kernel input is needed.
    diag = jnp.sum(qf * cf, axis=-1)

    q = encoded_q if matmul_dtype is None else encoded_q.astype(matmul_dtype)
    c = encoded_c if matmul_dtype is None else encoded_c.astype(matmul_dtype)

    Bp = max(128, _round_up(B, 128))
    padded = Bp != B
    if padded:
        pad = ((0, Bp - B), (0, 0))
        q = jnp.pad(q, pad)
        c = jnp.pad(c, pad)

    itemsize = jnp.dtype(q.dtype).itemsize
    cap = _vmem_capacity_bytes()
    tq, tk = _choose_tiles(Bp, D, itemsize, int(cap * 0.55))
    num_q, num_k = Bp // tq, Bp // tk

    in_specs = [
        pl.BlockSpec((tq, D), lambda i, k: (i, 0)),   # q rows (resident per row tile)
        pl.BlockSpec((tk, D), lambda i, k: (k, 0)),   # c rows streamed along k
        # NOTE: if per-step DMA is still exposed at small D, add
        # pipeline_mode=pl.Buffered(3) on the c spec above.
    ]
    args = [q, c]
    if padded:
        col = jnp.arange(Bp, dtype=jnp.int32)
        bias = jnp.where(col < B, 0.0, _NEG_LARGE).astype(jnp.float32)[None, :]
        in_specs.append(pl.BlockSpec((1, tk), lambda i, k: (0, k)))
        args.append(bias)

    footprint = _footprint_bytes(tq, tk, D, itemsize)
    vmem_limit = int(min(cap * 0.85, max(footprint + (8 << 20), 32 << 20)))

    kernel = _make_kernel(tq, tk, num_k, padded)

    lse = pl.pallas_call(
        kernel,
        out_shape=jax.ShapeDtypeStruct((Bp, 1), jnp.float32),
        grid_spec=pltpu.PrefetchScalarGridSpec(
            num_scalar_prefetch=0,
            grid=(num_q, num_k),                      # reduction axis last
            in_specs=in_specs,
            out_specs=pl.BlockSpec((tq, 1), lambda i, k: (i, 0)),
            scratch_shapes=[
                pltpu.VMEM((tq, 128), jnp.float32),   # per-lane running max
                pltpu.VMEM((tq, 128), jnp.float32),   # per-lane running sum(exp)
            ],
        ),
        compiler_params=pltpu.CompilerParams(
            dimension_semantics=("parallel", "arbitrary"),
            vmem_limit_bytes=vmem_limit,
        ),
        cost_estimate=pl.CostEstimate(
            flops=2 * Bp * Bp * D,
            transcendentals=Bp * Bp + 2 * Bp,
            # c is re-streamed num_q times; q once; small bias + output.
            bytes_accessed=(num_q + 1) * Bp * D * itemsize + 2 * Bp * 4,
        ),
    )(*args)

    lse = lse[:B, 0]
    return jnp.mean(lse - diag)


def _reference_loss(q, c):
    # scores = q @ c.T ; CE(scores, arange(B))
    scores = jax.lax.dot_general(q, c, (((1,), (1,)), ((), ())),
                                 preferred_element_type=jnp.float32)
    lse = jax.scipy.special.logsumexp(scores, axis=-1)
    diag = jnp.sum(q * c, axis=-1)
    return jnp.mean(lse - diag)


if __name__ == "__main__":
    key = jax.random.PRNGKey(0)
    kq, kc = jax.random.split(key)
    B, D = 8, 32  # small batch of query / context embeddings
    encoded_q = jax.random.normal(kq, (B, D), dtype=jnp.float32)
    encoded_c = jax.random.normal(kc, (B, D), dtype=jnp.float32)

    ref = _reference_loss(encoded_q, encoded_c)

    # f32 MXU-input path (tight check).
    loss_f32 = jax.jit(
        lambda a, b: encoders_loss(a, b, matmul_dtype=jnp.float32)
    )(encoded_q, encoded_c)
    loss_f32 = jax.block_until_ready(loss_f32)
    assert jnp.allclose(loss_f32, ref, atol=2e-2, rtol=2e-2), (loss_f32, ref)

    # Default (bf16 MXU inputs, f32 accumulation) path.
    loss = jax.jit(encoders_loss)(encoded_q, encoded_c)
    loss = jax.block_until_ready(loss)
    assert jnp.allclose(loss, ref, atol=6e-2, rtol=6e-2), (loss, ref)

    print("KERNEL_OK")
</pallas_src>

<mosaic_0001>
module attributes {stable_mosaic.version = 11 : i64} {
  func.func @body(%arg0: i32, %arg1: i32, %arg2: memref<128x32xf32, #tpu.memory_space<vmem>>, %arg3: memref<128x32xf32, #tpu.memory_space<vmem>>, %arg4: memref<1x128xf32, #tpu.memory_space<vmem>>, %arg5: memref<128x1xf32, #tpu.memory_space<vmem>>, %arg6: memref<128x128xf32, #tpu.memory_space<vmem>>, %arg7: memref<128x128xf32, #tpu.memory_space<vmem>>) attributes {dimension_semantics = [#tpu.dimension_semantics<parallel>, #tpu.dimension_semantics<arbitrary>], iteration_bounds = array<i64: 1, 1>, scalar_prefetch = 0 : i64, scratch_operands = 2 : i64, tpu.core_type = #tpu.core_type<tc>, window_params = [{transform_indices = @transform_0, window_bounds = array<i64: 128, 32>}, {transform_indices = @transform_1, window_bounds = array<i64: 128, 32>}, {transform_indices = @transform_2, window_bounds = array<i64: 1, 128>}, {transform_indices = @transform_3, window_bounds = array<i64: 128, 1>}]} {
    %c0_i32 = arith.constant 0 : i32
    %0 = arith.cmpi eq, %arg1, %c0_i32 : i32
    %1 = arith.extui %0 : i1 to i32
    %c0_i32_0 = arith.constant 0 : i32
    %2 = arith.cmpi ne, %1, %c0_i32_0 : i32
    scf.if %2 {
      %cst_16 = arith.constant -1.70141173E+38 : f32
      %23 = vector.broadcast %cst_16 : f32 to vector<128x128xf32>
      %c0_17 = arith.constant 0 : index
      %c0_18 = arith.constant 0 : index
      %24 = vector.load %arg6[%c0_17, %c0_18] : memref<128x128xf32, #tpu.memory_space<vmem>>, vector<128x128xf32>
      tpu.vector_store %arg6[%c0_17, %c0_18], %23 {strides = array<i32>} : memref<128x128xf32, #tpu.memory_space<vmem>>, vector<128x128xf32>,
      %cst_19 = arith.constant 0.000000e+00 : f32
      %25 = vector.broadcast %cst_19 : f32 to vector<128x128xf32>
      %c0_20 = arith.constant 0 : index
      %c0_21 = arith.constant 0 : index
      %26 = vector.load %arg7[%c0_20, %c0_21] : memref<128x128xf32, #tpu.memory_space<vmem>>, vector<128x128xf32>
      tpu.vector_store %arg7[%c0_20, %c0_21], %25 {strides = array<i32>} : memref<128x128xf32, #tpu.memory_space<vmem>>, vector<128x128xf32>,
    } else {
    }
    %c0 = arith.constant 0 : index
    %c0_1 = arith.constant 0 : index
    %3 = vector.load %arg2[%c0, %c0_1] : memref<128x32xf32, #tpu.memory_space<vmem>>, vector<128x32xf32>
    %c0_2 = arith.constant 0 : index
    %c0_3 = arith.constant 0 : index
    %4 = vector.load %arg3[%c0_2, %c0_3] : memref<128x32xf32, #tpu.memory_space<vmem>>, vector<128x32xf32>
    %cst = arith.constant dense<0.000000e+00> : vector<128x128xf32>
    %5 = tpu.matmul %3, %4, %cst {dimension_numbers = #tpu.dot_dimension_numbers<[1], [1], [0], [0], [0, 0, 1, 0], [], []>} : vector<128x32xf32>, vector<128x32xf32>, vector<128x128xf32> -> vector<128x128xf32>
    %c0_4 = arith.constant 0 : index
    %c0_5 = arith.constant 0 : index
    %6 = vector.load %arg4[%c0_4, %c0_5] : memref<1x128xf32, #tpu.memory_space<vmem>>, vector<1x128xf32>
    %7 = vector.broadcast %6 : vector<1x128xf32> to vector<128x128xf32>
    %8 = arith.addf %5, %7 : vector<128x128xf32>
    %c0_6 = arith.constant 0 : index
    %c0_7 = arith.constant 0 : index
    %9 = vector.load %arg6[%c0_6, %c0_7] : memref<128x128xf32, #tpu.memory_space<vmem>>, vector<128x128xf32>
    %10 = arith.maximumf %9, %8 : vector<128x128xf32>
    %11 = arith.subf %9, %10 : vector<128x128xf32>
    %12 = math.exp %11 : vector<128x128xf32>
    %c0_8 = arith.constant 0 : index
    %c0_9 = arith.constant 0 : index
    %13 = vector.load %arg7[%c0_8, %c0_9] : memref<128x128xf32, #tpu.memory_space<vmem>>, vector<128x128xf32>
    %14 = arith.mulf %12, %13 : vector<128x128xf32>
    %15 = arith.subf %8, %10 : vector<128x128xf32>
    %16 = math.exp %15 : vector<128x128xf32>
    %17 = arith.addf %14, %16 : vector<128x128xf32>
    %c0_10 = arith.constant 0 : index
    %c0_11 = arith.constant 0 : index
    %18 = vector.load %arg6[%c0_10, %c0_11] : memref<128x128xf32, #tpu.memory_space<vmem>>, vector<128x128xf32>
    tpu.vector_store %arg6[%c0_10, %c0_11], %10 {strides = array<i32>} : memref<128x128xf32, #tpu.memory_space<vmem>>, vector<128x128xf32>,
    %c0_12 = arith.constant 0 : index
    %c0_13 = arith.constant 0 : index
    %19 = vector.load %arg7[%c0_12, %c0_13] : memref<128x128xf32, #tpu.memory_space<vmem>>, vector<128x128xf32>
    tpu.vector_store %arg7[%c0_12, %c0_13], %17 {strides = array<i32>} : memref<128x128xf32, #tpu.memory_space<vmem>>, vector<128x128xf32>,
    %c0_i32_14 = arith.constant 0 : i32
    %20 = arith.cmpi eq, %arg1, %c0_i32_14 : i32
    %21 = arith.extui %20 : i1 to i32
    %c0_i32_15 = arith.constant 0 : i32
    %22 = arith.cmpi ne, %21, %c0_i32_15 : i32
    scf.if %22 {
      %c0_16 = arith.constant 0 : index
      %c0_17 = arith.constant 0 : index
      %23 = vector.load %arg6[%c0_16, %c0_17] : memref<128x128xf32, #tpu.memory_space<vmem>>, vector<128x128xf32>
      %cst_18 = arith.constant dense<0xFF800000> : vector<128xf32>
      %24 = vector.multi_reduction <maximumf>, %23, %cst_18 [1] : vector<128x128xf32> to vector<128xf32>
      %25 = vector.shape_cast %24 : vector<128xf32> to vector<128x1xf32>
      %26 = vector.broadcast %25 : vector<128x1xf32> to vector<128x128xf32>
      %27 = arith.subf %23, %26 : vector<128x128xf32>
      %28 = math.exp %27 : vector<128x128xf32>
      %c0_19 = arith.constant 0 : index
      %c0_20 = arith.constant 0 : index
      %29 = vector.load %arg7[%c0_19, %c0_20] : memref<128x128xf32, #tpu.memory_space<vmem>>, vector<128x128xf32>
      %30 = arith.mulf %28, %29 : vector<128x128xf32>
      %cst_21 = arith.constant dense<0.000000e+00> : vector<128xf32>
      %31 = vector.multi_reduction <add>, %30, %cst_21 [1] : vector<128x128xf32> to vector<128xf32>
      %32 = vector.shape_cast %31 : vector<128xf32> to vector<128x1xf32>
      %33 = math.log %32 : vector<128x1xf32>
      %34 = arith.addf %25, %33 : vector<128x1xf32>
      %c0_22 = arith.constant 0 : index
      %c0_23 = arith.constant 0 : index
      %35 = vector.load %arg5[%c0_22, %c0_23] : memref<128x1xf32, #tpu.memory_space<vmem>>, vector<128x1xf32>
      tpu.vector_store %arg5[%c0_22, %c0_23], %34 {strides = array<i32>} : memref<128x1xf32, #tpu.memory_space<vmem>>, vector<128x1xf32>,
    } else {
    }
    return
  }
  func.func @transform_0(%arg0: i32, %arg1: i32) -> (i32, i32) {
    %c0_i32 = arith.constant 0 : i32
    %c0_i32_0 = arith.constant 0 : i32
    return %arg0, %c0_i32 : i32, i32
  }
  func.func @transform_1(%arg0: i32, %arg1: i32) -> (i32, i32) {
    %c0_i32 = arith.constant 0 : i32
    %c0_i32_0 = arith.constant 0 : i32
    return %arg1, %c0_i32 : i32, i32
  }
  func.func @transform_2(%arg0: i32, %arg1: i32) -> (i32, i32) {
    %c0_i32 = arith.constant 0 : i32
    %c0_i32_0 = arith.constant 0 : i32
    return %c0_i32, %arg1 : i32, i32
  }
  func.func @transform_3(%arg0: i32, %arg1: i32) -> (i32, i32) {
    %c0_i32 = arith.constant 0 : i32
    %c0_i32_0 = arith.constant 0 : i32
    return %arg0, %c0_i32 : i32, i32
  }
}

</mosaic_0001>

<llo_original>
// kernel: _lambda_.1
$region0: #{_lambda_.1}
  #allocation0 [shape = 'u32[]', space=smem, size = 0x4, offset = 0x4, fixed_abs, tag = 'smem constant byte address 0x4 - core index']
  #allocation1 [shape = 'u32[144,128]{1,0:T(1,128)}', space=vmem, size = 0x12000, scoped, tag = 'internal scratch']
  #allocation2 [shape = 'f32[128,128]{1,0:T(8,128)}', space=vmem, size = 0x10000, scoped, tag = 'scratch operand']
  #allocation3 [shape = 'f32[128,128]{1,0:T(8,128)}', space=vmem, size = 0x10000, scoped, tag = 'scratch operand']
  %s0 = inlined_call_operand.vmem [shape: f32[128,32], index: 0, kind: input, shape index: {}]
  %s1 = inlined_call_operand.vmem [shape: f32[128,32], index: 1, kind: input, shape index: {}]
  %s2 = inlined_call_operand.vmem [shape: f32[1,128], index: 2, kind: input, shape index: {}]
  %s3 = inlined_call_operand.vmem [shape: f32[128,1], index: 3, kind: output, shape index: {}]
  %s4 = sld [smem:[#allocation0]]
  $region30: #{_lambda_.1} parent=0
    _
  %s6 = ssub.s32 1, %s4
  %s7 = scalar_select 0, %s6, %s4
  // Predicated region
  $region2: #{_lambda_.1} parent=0 // pred_check
    _
  $region3: #{_lambda_.1} parent=0 // pred_check_branch
    %9 = sbr.rel (0) target = $region5
  $region4: #{_lambda_.1} parent=0 // pred_region
    _
  $region5: #{_lambda_.1} parent=0 // pred_fallthru
    _
  // Predicated region
  $region6: #{_lambda_.1} parent=0 // pred_check
    _
  $region7: #{_lambda_.1} parent=0 // pred_check_branch
    %11 = sbr.rel (0) target = $region9
  $region8: #{_lambda_.1} parent=0 // pred_region
    _
  $region9: #{_lambda_.1} parent=0 // pred_fallthru
    _
  // Predicated region
  $region10: #{_lambda_.1} parent=0 // pred_check
    _
  $region11: #{_lambda_.1} parent=0 // pred_check_branch
    %13 = sbr.rel (0) target = $region13
  $region12: #{_lambda_.1} parent=0 // pred_region
    _
  $region13: #{_lambda_.1} parent=0 // pred_fallthru
    _
  %p14 = scmp.eq.s32.totalorder 0, 0
  // Predicated region
  $region14: #{_lambda_.1} parent=0 // pred_check
    %p15 = pneg %p14
  $region15: #{_lambda_.1} parent=0 // pred_check_branch
    %17 = sbr.rel (%p15) target = $region17
  $region16: #{_lambda_.1} parent=0 // pred_region
    %18 = vst [vmem:[#allocation2] sm:$0xff] -1.7014117e+38
    %19 = vst [vmem:[#allocation2 + $0x8] sm:$0xff] -1.7014117e+38
    %20 = vst [vmem:[#allocation2 + $0x10] sm:$0xff] -1.7014117e+38
    %21 = vst [vmem:[#allocation2 + $0x18] sm:$0xff] -1.7014117e+38
    %22 = vst [vmem:[#allocation2 + $0x20] sm:$0xff] -1.7014117e+38
    %23 = vst [vmem:[#allocation2 + $0x28] sm:$0xff] -1.7014117e+38
    %24 = vst [vmem:[#allocation2 + $0x30] sm:$0xff] -1.7014117e+38
    %25 = vst [vmem:[#allocation2 + $0x38] sm:$0xff] -1.7014117e+38
    %26 = vst [vmem:[#allocation2 + $0x40] sm:$0xff] -1.7014117e+38
    %27 = vst [vmem:[#allocation2 + $0x48] sm:$0xff] -1.7014117e+38
    %28 = vst [vmem:[#allocation2 + $0x50] sm:$0xff] -1.7014117e+38
    %29 = vst [vmem:[#allocation2 + $0x58] sm:$0xff] -1.7014117e+38
    %30 = vst [vmem:[#allocation2 + $0x60] sm:$0xff] -1.7014117e+38
    %31 = vst [vmem:[#allocation2 + $0x68] sm:$0xff] -1.7014117e+38
    %32 = vst [vmem:[#allocation2 + $0x70] sm:$0xff] -1.7014117e+38
    %33 = vst [vmem:[#allocation2 + $0x78] sm:$0xff] -1.7014117e+38
    %34 = vst [vmem:[#allocation3] sm:$0xff] 0.0
    %35 = vst [vmem:[#allocation3 + $0x8] sm:$0xff] 0.0
    %36 = vst [vmem:[#allocation3 + $0x10] sm:$0xff] 0.0
    %37 = vst [vmem:[#allocation3 + $0x18] sm:$0xff] 0.0
    %38 = vst [vmem:[#allocation3 + $0x20] sm:$0xff] 0.0
    %39 = vst [vmem:[#allocation3 + $0x28] sm:$0xff] 0.0
    %40 = vst [vmem:[#allocation3 + $0x30] sm:$0xff] 0.0
    %41 = vst [vmem:[#allocation3 + $0x38] sm:$0xff] 0.0
    %42 = vst [vmem:[#allocation3 + $0x40] sm:$0xff] 0.0
    %43 = vst [vmem:[#allocation3 + $0x48] sm:$0xff] 0.0
    %44 = vst [vmem:[#allocation3 + $0x50] sm:$0xff] 0.0
    %45 = vst [vmem:[#allocation3 + $0x58] sm:$0xff] 0.0
    %46 = vst [vmem:[#allocation3 + $0x60] sm:$0xff] 0.0
    %47 = vst [vmem:[#allocation3 + $0x68] sm:$0xff] 0.0
    %48 = vst [vmem:[#allocation3 + $0x70] sm:$0xff] 0.0
    %49 = vst [vmem:[#allocation3 + $0x78] sm:$0xff] 0.0
  $region17: #{_lambda_.1} parent=0 // pred_fallthru
    _
  %v50 = vld [vmem:[%s0] sm:$0xff]
  %v51 = vld [vmem:[%s0 + $0x8] sm:$0xff]
  %v52 = vld [vmem:[%s0 + $0x10] sm:$0xff]
  %v53 = vld [vmem:[%s0 + $0x18] sm:$0xff]
  %v54 = vld [vmem:[%s0 + $0x20] sm:$0xff]
  %v55 = vld [vmem:[%s0 + $0x28] sm:$0xff]
  %v56 = vld [vmem:[%s0 + $0x30] sm:$0xff]
  %v57 = vld [vmem:[%s0 + $0x38] sm:$0xff]
  %v58 = vld [vmem:[%s0 + $0x40] sm:$0xff]
  %v59 = vld [vmem:[%s0 + $0x48] sm:$0xff]
  %v60 = vld [vmem:[%s0 + $0x50] sm:$0xff]
  %v61 = vld [vmem:[%s0 + $0x58] sm:$0xff]
  %v62 = vld [vmem:[%s0 + $0x60] sm:$0xff]
  %v63 = vld [vmem:[%s0 + $0x68] sm:$0xff]
  %v64 = vld [vmem:[%s0 + $0x70] sm:$0xff]
  %v65 = vld [vmem:[%s0 + $0x78] sm:$0xff]
  %v66 = vld [vmem:[%s1] sm:$0xff]
  %v67 = vld [vmem:[%s1 + $0x8] sm:$0xff]
  %v68 = vld [vmem:[%s1 + $0x10] sm:$0xff]
  %v69 = vld [vmem:[%s1 + $0x18] sm:$0xff]
  %v70 = vld [vmem:[%s1 + $0x20] sm:$0xff]
  %v71 = vld [vmem:[%s1 + $0x28] sm:$0xff]
  %v72 = vld [vmem:[%s1 + $0x30] sm:$0xff]
  %v73 = vld [vmem:[%s1 + $0x38] sm:$0xff]
  %v74 = vld [vmem:[%s1 + $0x40] sm:$0xff]
  %v75 = vld [vmem:[%s1 + $0x48] sm:$0xff]
  %v76 = vld [vmem:[%s1 + $0x50] sm:$0xff]
  %v77 = vld [vmem:[%s1 + $0x58] sm:$0xff]
  %v78 = vld [vmem:[%s1 + $0x60] sm:$0xff]
  %v79 = vld [vmem:[%s1 + $0x68] sm:$0xff]
  %v80 = vld [vmem:[%s1 + $0x70] sm:$0xff]
  %v81 = vld [vmem:[%s1 + $0x78] sm:$0xff]
  %v82 = vld [vmem:[%s2] sm:$0x1]
  %v84 = vlaneseq
  %v85 = vshrl.u32 %v84, 7
  %v86 = vsub.s32 0, %v85
  %v87 = vrot.slane %v82, %v86
  %vm89 = vcmask 261120
  %v91 = vsel %vm89, %v50, 0
  %v94 = vsel %vm89, %v51, 0
  %v97 = vsel %vm89, %v52, 0
  %v100 = vsel %vm89, %v53, 0
  %v103 = vsel %vm89, %v54, 0
  %v106 = vsel %vm89, %v55, 0
  %v109 = vsel %vm89, %v56, 0
  %v112 = vsel %vm89, %v57, 0
  %v115 = vsel %vm89, %v58, 0
  %v118 = vsel %vm89, %v59, 0
  %v121 = vsel %vm89, %v60, 0
  %v124 = vsel %vm89, %v61, 0
  %v127 = vsel %vm89, %v62, 0
  %v130 = vsel %vm89, %v63, 0
  %v133 = vsel %vm89, %v64, 0
  %v136 = vsel %vm89, %v65, 0
  %v139 = vsel %vm89, %v66, 0
  %v142 = vsel %vm89, %v67, 0
  %v145 = vsel %vm89, %v68, 0
  %v148 = vsel %vm89, %v69, 0
  %v151 = vsel %vm89, %v70, 0
  %v154 = vsel %vm89, %v71, 0
  %v157 = vsel %vm89, %v72, 0
  %v160 = vsel %vm89, %v73, 0
  %v163 = vsel %vm89, %v74, 0
  %v166 = vsel %vm89, %v75, 0
  %v169 = vsel %vm89, %v76, 0
  %v172 = vsel %vm89, %v77, 0
  %v175 = vsel %vm89, %v78, 0
  %v178 = vsel %vm89, %v79, 0
  %v181 = vsel %vm89, %v80, 0
  %v184 = vsel %vm89, %v81, 0
  %186 = vmatprep.subr.mxu0 0.0
  %187 = vmatpush1.xpose.msra.mxu0 %v139
  %188 = vmatprep.subr.mxu0 0.0
  %189 = vmatpush1.xpose.msra.mxu0 %v142
  %190 = vmatprep.subr.mxu0 0.0
  %191 = vmatpush1.xpose.msra.mxu0 %v145
  %192 = vmatprep.subr.mxu0 0.0
  %193 = vmatpush1.xpose.msra.mxu0 %v148
  %194 = vmatprep.subr.mxu0 0.0
  %195 = vmatpush1.xpose.msra.mxu0 %v151
  %196 = vmatprep.subr.mxu0 0.0
  %197 = vmatpush1.xpose.msra.mxu0 %v154
  %198 = vmatprep.subr.mxu0 0.0
  %199 = vmatpush1.xpose.msra.mxu0 %v157
  %200 = vmatprep.subr.mxu0 0.0
  %201 = vmatpush1.xpose.msra.mxu0 %v160
  %202 = vmatprep.subr.mxu0 0.0
  %203 = vmatpush1.xpose.msra.mxu0 %v163
  %204 = vmatprep.subr.mxu0 0.0
  %205 = vmatpush1.xpose.msra.mxu0 %v166
  %206 = vmatprep.subr.mxu0 0.0
  %207 = vmatpush1.xpose.msra.mxu0 %v169
  %208 = vmatprep.subr.mxu0 0.0
  %209 = vmatpush1.xpose.msra.mxu0 %v172
  %210 = vmatprep.subr.mxu0 0.0
  %211 = vmatpush1.xpose.msra.mxu0 %v175
  %212 = vmatprep.subr.mxu0 0.0
  %213 = vmatpush1.xpose.msra.mxu0 %v178
  %214 = vmatprep.subr.mxu0 0.0
  %215 = vmatpush1.xpose.msra.mxu0 %v181
  %216 = vmatprep.subr.mxu0 0.0
  %217 = vmatpush1.xpose.msra.mxu0 %v184
  %218 = vmatprep.subr.mxu0 0.0
  %219 = vmatpush1.xpose.msra.mxu0 0.0
  %220 = vmatprep.subr.mxu0 0.0
  %221 = vmatpush1.xpose.msra.mxu0 0.0
  %222 = vmatprep.subr.mxu0 0.0
  %223 = vmatpush1.xpose.msra.mxu0 0.0
  %224 = vmatprep.subr.mxu0 0.0
  %225 = vmatpush1.xpose.msra.mxu0 0.0
  %226 = vmatprep.subr.mxu0 0.0
  %227 = vmatpush1.xpose.msra.mxu0 0.0
  %228 = vmatprep.subr.mxu0 0.0
  %229 = vmatpush1.xpose.msra.mxu0 0.0
  %230 = vmatprep.subr.mxu0 0.0
  %231 = vmatpush1.xpose.msra.mxu0 0.0
  %232 = vmatprep.subr.mxu0 0.0
  %233 = vmatpush1.xpose.msra.mxu0 0.0
  %234 = vmatprep.subr.mxu0 0.0
  %235 = vmatpush1.xpose.msra.mxu0 0.0
  %236 = vmatprep.subr.mxu0 0.0
  %237 = vmatpush1.xpose.msra.mxu0 0.0
  %238 = vmatprep.subr.mxu0 0.0
  %239 = vmatpush1.xpose.msra.mxu0 0.0
  %240 = vmatprep.subr.mxu0 0.0
  %241 = vmatpush1.xpose.msra.mxu0 0.0
  %242 = vmatprep.subr.mxu0 0.0
  %243 = vmatpush1.xpose.msra.mxu0 0.0
  %244 = vmatprep.subr.mxu0 0.0
  %245 = vmatpush1.xpose.msra.mxu0 0.0
  %246 = vmatprep.subr.mxu0 0.0
  %247 = vmatpush1.xpose.msra.mxu0 0.0
  %248 = vmatprep.subr.mxu0 0.0
  %249 = vmatpush1.xpose.msra.mxu0 0.0
  %250 = vmatprep.mubr.f32.mxu0 0.0
  %251 = vmatmul.mubr.f32.gmra.mrb[0].mxu0 %v91
  %v252 = vpop.f32.mrb[0].mxu0
  %v253 = vadd.f32 %v87, %v252
  %v254 = vpop.f32.mrb[0].mxu0
  %255 = vmatprep.mubr.f32.mxu0 0.0
  %256 = vmatmul.mubr.f32.gmra.mrb[0].mxu0 %v94
  %v257 = vpop.f32.mrb[0].mxu0
  %v258 = vadd.f32 %v87, %v257
  %v259 = vpop.f32.mrb[0].mxu0
  %260 = vmatprep.mubr.f32.mxu0 0.0
  %261 = vmatmul.mubr.f32.gmra.mrb[0].mxu0 %v97
  %v262 = vpop.f32.mrb[0].mxu0
  %v263 = vadd.f32 %v87, %v262
  %v264 = vpop.f32.mrb[0].mxu0
  %265 = vmatprep.mubr.f32.mxu0 0.0
  %266 = vmatmul.mubr.f32.gmra.mrb[0].mxu0 %v100
  %v267 = vpop.f32.mrb[0].mxu0
  %v268 = vadd.f32 %v87, %v267
  %v269 = vpop.f32.mrb[0].mxu0
  %270 = vmatprep.mubr.f32.mxu0 0.0
  %271 = vmatmul.mubr.f32.gmra.mrb[0].mxu0 %v103
  %v272 = vpop.f32.mrb[0].mxu0
  %v273 = vadd.f32 %v87, %v272
  %v274 = vpop.f32.mrb[0].mxu0
  %275 = vmatprep.mubr.f32.mxu0 0.0
  %276 = vmatmul.mubr.f32.gmra.mrb[0].mxu0 %v106
  %v277 = vpop.f32.mrb[0].mxu0
  %v278 = vadd.f32 %v87, %v277
  %v279 = vpop.f32.mrb[0].mxu0
  %280 = vmatprep.mubr.f32.mxu0 0.0
  %281 = vmatmul.mubr.f32.gmra.mrb[0].mxu0 %v109
  %v282 = vpop.f32.mrb[0].mxu0
  %v283 = vadd.f32 %v87, %v282
  %v284 = vpop.f32.mrb[0].mxu0
  %285 = vmatprep.mubr.f32.mxu0 0.0
  %286 = vmatmul.mubr.f32.gmra.mrb[0].mxu0 %v112
  %v287 = vpop.f32.mrb[0].mxu0
  %v288 = vadd.f32 %v87, %v287
  %v289 = vpop.f32.mrb[0].mxu0
  %290 = vmatprep.mubr.f32.mxu0 0.0
  %291 = vmatmul.mubr.f32.gmra.mrb[0].mxu0 %v115
  %v292 = vpop.f32.mrb[0].mxu0
  %v293 = vadd.f32 %v87, %v292
  %v294 = vpop.f32.mrb[0].mxu0
  %295 = vmatprep.mubr.f32.mxu0 0.0
  %296 = vmatmul.mubr.f32.gmra.mrb[0].mxu0 %v118
  %v297 = vpop.f32.mrb[0].mxu0
  %v298 = vadd.f32 %v87, %v297
  %v299 = vpop.f32.mrb[0].mxu0
  %300 = vmatprep.mubr.f32.mxu0 0.0
  %301 = vmatmul.mubr.f32.gmra.mrb[0].mxu0 %v121
  %v302 = vpop.f32.mrb[0].mxu0
  %v303 = vadd.f32 %v87, %v302
  %v304 = vpop.f32.mrb[0].mxu0
  %305 = vmatprep.mubr.f32.mxu0 0.0
  %306 = vmatmul.mubr.f32.gmra.mrb[0].mxu0 %v124
  %v307 = vpop.f32.mrb[0].mxu0
  %v308 = vadd.f32 %v87, %v307
  %v309 = vpop.f32.mrb[0].mxu0
  %310 = vmatprep.mubr.f32.mxu0 0.0
  %311 = vmatmul.mubr.f32.gmra.mrb[0].mxu0 %v127
  %v312 = vpop.f32.mrb[0].mxu0
  %v313 = vadd.f32 %v87, %v312
  %v314 = vpop.f32.mrb[0].mxu0
  %315 = vmatprep.mubr.f32.mxu0 0.0
  %316 = vmatmul.mubr.f32.gmra.mrb[0].mxu0 %v130
  %v317 = vpop.f32.mrb[0].mxu0
  %v318 = vadd.f32 %v87, %v317
  %v319 = vpop.f32.mrb[0].mxu0
  %320 = vmatprep.mubr.f32.mxu0 0.0
  %321 = vmatmul.mubr.f32.gmra.mrb[0].mxu0 %v133
  %v322 = vpop.f32.mrb[0].mxu0
  %v323 = vadd.f32 %v87, %v322
  %v324 = vpop.f32.mrb[0].mxu0
  %325 = vmatprep.mubr.f32.mxu0 0.0
  %326 = vmatmul.mubr.f32.gmra.mrb[0].mxu0 %v136
  %v327 = vpop.f32.mrb[0].mxu0
  %v328 = vadd.f32 %v87, %v327
  %v329 = vpop.f32.mrb[0].mxu0
  %330 = vdwg.mxu0
  %v331 = vld [vmem:[#allocation2] sm:$0xff]
  %v332 = vld [vmem:[#allocation2 + $0x8] sm:$0xff]
  %v333 = vld [vmem:[#allocation2 + $0x10] sm:$0xff]
  %v334 = vld [vmem:[#allocation2 + $0x18] sm:$0xff]
  %v335 = vld [vmem:[#allocation2 + $0x20] sm:$0xff]
  %v336 = vld [vmem:[#allocation2 + $0x28] sm:$0xff]
  %v337 = vld [vmem:[#allocation2 + $0x30] sm:$0xff]
  %v338 = vld [vmem:[#allocation2 + $0x38] sm:$0xff]
  %v339 = vld [vmem:[#allocation2 + $0x40] sm:$0xff]
  %v340 = vld [vmem:[#allocation2 + $0x48] sm:$0xff]
  %v341 = vld [vmem:[#allocation2 + $0x50] sm:$0xff]
  %v342 = vld [vmem:[#allocation2 + $0x58] sm:$0xff]
  %v343 = vld [vmem:[#allocation2 + $0x60] sm:$0xff]
  %v344 = vld [vmem:[#allocation2 + $0x68] sm:$0xff]
  %v345 = vld [vmem:[#allocation2 + $0x70] sm:$0xff]
  %v346 = vld [vmem:[#allocation2 + $0x78] sm:$0xff]
  %v347 = vmax.f32 %v331, %v253
  %v348 = vmax.f32 %v332, %v258
  %v349 = vmax.f32 %v333, %v263
  %v350 = vmax.f32 %v334, %v268
  %v351 = vmax.f32 %v335, %v273
  %v352 = vmax.f32 %v336, %v278
  %v353 = vmax.f32 %v337, %v283
  %v354 = vmax.f32 %v338, %v288
  %v355 = vmax.f32 %v339, %v293
  %v356 = vmax.f32 %v340, %v298
  %v357 = vmax.f32 %v341, %v303
  %v358 = vmax.f32 %v342, %v308
  %v359 = vmax.f32 %v343, %v313
  %v360 = vmax.f32 %v344, %v318
  %v361 = vmax.f32 %v345, %v323
  %v362 = vmax.f32 %v346, %v328
  %v363 = vsub.f32 %v331, %v347
  %v364 = vsub.f32 %v332, %v348
  %v365 = vsub.f32 %v333, %v349
  %v366 = vsub.f32 %v334, %v350
  %v367 = vsub.f32 %v335, %v351
  %v368 = vsub.f32 %v336, %v352
  %v369 = vsub.f32 %v337, %v353
  %v370 = vsub.f32 %v338, %v354
  %v371 = vsub.f32 %v339, %v355
  %v372 = vsub.f32 %v340, %v356
  %v373 = vsub.f32 %v341, %v357
  %v374 = vsub.f32 %v342, %v358
  %v375 = vsub.f32 %v343, %v359
  %v376 = vsub.f32 %v344, %v360
  %v377 = vsub.f32 %v345, %v361
  %v378 = vsub.f32 %v346, %v362
  %v379 = vmul.f32 %v363, 1.442695
  %v380 = vpow.pop %v379
  %v381 = vmul.f32 %v364, 1.442695
  %v382 = vpow.pop %v381
  %v383 = vmul.f32 %v365, 1.442695
  %v384 = vpow.pop %v383
  %v385 = vmul.f32 %v366, 1.442695
  %v386 = vpow.pop %v385
  %v387 = vmul.f32 %v367, 1.442695
  %v388 = vpow.pop %v387
  %v389 = vmul.f32 %v368, 1.442695
  %v390 = vpow.pop %v389
  %v391 = vmul.f32 %v369, 1.442695
  %v392 = vpow.pop %v391
  %v393 = vmul.f32 %v370, 1.442695
  %v394 = vpow.pop %v393
  %v395 = vmul.f32 %v371, 1.442695
  %v396 = vpow.pop %v395
  %v397 = vmul.f32 %v372, 1.442695
  %v398 = vpow.pop %v397
  %v399 = vmul.f32 %v373, 1.442695
  %v400 = vpow.pop %v399
  %v401 = vmul.f32 %v374, 1.442695
  %v402 = vpow.pop %v401
  %v403 = vmul.f32 %v375, 1.442695
  %v404 = vpow.pop %v403
  %v405 = vmul.f32 %v376, 1.442695
  %v406 = vpow.pop %v405
  %v407 = vmul.f32 %v377, 1.442695
  %v408 = vpow.pop %v407
  %v409 = vmul.f32 %v378, 1.442695
  %v410 = vpow.pop %v409
  %v411 = vld [vmem:[#allocation3] sm:$0xff]
  %v412 = vld [vmem:[#allocation3 + $0x8] sm:$0xff]
  %v413 = vld [vmem:[#allocation3 + $0x10] sm:$0xff]
  %v414 = vld [vmem:[#allocation3 + $0x18] sm:$0xff]
  %v415 = vld [vmem:[#allocation3 + $0x20] sm:$0xff]
  %v416 = vld [vmem:[#allocation3 + $0x28] sm:$0xff]
  %v417 = vld [vmem:[#allocation3 + $0x30] sm:$0xff]
  %v418 = vld [vmem:[#allocation3 + $0x38] sm:$0xff]
  %v419 = vld [vmem:[#allocation3 + $0x40] sm:$0xff]
  %v420 = vld [vmem:[#allocation3 + $0x48] sm:$0xff]
  %v421 = vld [vmem:[#allocation3 + $0x50] sm:$0xff]
  %v422 = vld [vmem:[#allocation3 + $0x58] sm:$0xff]
  %v423 = vld [vmem:[#allocation3 + $0x60] sm:$0xff]
  %v424 = vld [vmem:[#allocation3 + $0x68] sm:$0xff]
  %v425 = vld [vmem:[#allocation3 + $0x70] sm:$0xff]
  %v426 = vld [vmem:[#allocation3 + $0x78] sm:$0xff]
  %v427 = vmul.f32 %v380, %v411
  %v428 = vmul.f32 %v382, %v412
  %v429 = vmul.f32 %v384, %v413
  %v430 = vmul.f32 %v386, %v414
  %v431 = vmul.f32 %v388, %v415
  %v432 = vmul.f32 %v390, %v416
  %v433 = vmul.f32 %v392, %v417
  %v434 = vmul.f32 %v394, %v418
  %v435 = vmul.f32 %v396, %v419
  %v436 = vmul.f32 %v398, %v420
  %v437 = vmul.f32 %v400, %v421
  %v438 = vmul.f32 %v402, %v422
  %v439 = vmul.f32 %v404, %v423
  %v440 = vmul.f32 %v406, %v424
  %v441 = vmul.f32 %v408, %v425
  %v442 = vmul.f32 %v410, %v426
  %v443 = vsub.f32 %v253, %v347
  %v444 = vsub.f32 %v258, %v348
  %v445 = vsub.f32 %v263, %v349
  %v446 = vsub.f32 %v268, %v350
  %v447 = vsub.f32 %v273, %v351
  %v448 = vsub.f32 %v278, %v352
  %v449 = vsub.f32 %v283, %v353
  %v450 = vsub.f32 %v288, %v354
  %v451 = vsub.f32 %v293, %v355
  %v452 = vsub.f32 %v298, %v356
  %v453 = vsub.f32 %v303, %v357
  %v454 = vsub.f32 %v308, %v358
  %v455 = vsub.f32 %v313, %v359
  %v456 = vsub.f32 %v318, %v360
  %v457 = vsub.f32 %v323, %v361
  %v458 = vsub.f32 %v328, %v362
  %v459 = vmul.f32 %v443, 1.442695
  %v460 = vpow.pop %v459
  %v461 = vmul.f32 %v444, 1.442695
  %v462 = vpow.pop %v461
  %v463 = vmul.f32 %v445, 1.442695
  %v464 = vpow.pop %v463
  %v465 = vmul.f32 %v446, 1.442695
  %v466 = vpow.pop %v465
  %v467 = vmul.f32 %v447, 1.442695
  %v468 = vpow.pop %v467
  %v469 = vmul.f32 %v448, 1.442695
  %v470 = vpow.pop %v469
  %v471 = vmul.f32 %v449, 1.442695
  %v472 = vpow.pop %v471
  %v473 = vmul.f32 %v450, 1.442695
  %v474 = vpow.pop %v473
  %v475 = vmul.f32 %v451, 1.442695
  %v476 = vpow.pop %v475
  %v477 = vmul.f32 %v452, 1.442695
  %v478 = vpow.pop %v477
  %v479 = vmul.f32 %v453, 1.442695
  %v480 = vpow.pop %v479
  %v481 = vmul.f32 %v454, 1.442695
  %v482 = vpow.pop %v481
  %v483 = vmul.f32 %v455, 1.442695
  %v484 = vpow.pop %v483
  %v485 = vmul.f32 %v456, 1.442695
  %v486 = vpow.pop %v485
  %v487 = vmul.f32 %v457, 1.442695
  %v488 = vpow.pop %v487
  %v489 = vmul.f32 %v458, 1.442695
  %v490 = vpow.pop %v489
  %v491 = vadd.f32 %v427, %v460
  %v492 = vadd.f32 %v428, %v462
  %v493 = vadd.f32 %v429, %v464
  %v494 = vadd.f32 %v430, %v466
  %v495 = vadd.f32 %v431, %v468
  %v496 = vadd.f32 %v432, %v470
  %v497 = vadd.f32 %v433, %v472
  %v498 = vadd.f32 %v434, %v474
  %v499 = vadd.f32 %v435, %v476
  %v500 = vadd.f32 %v436, %v478
  %v501 = vadd.f32 %v437, %v480
  %v502 = vadd.f32 %v438, %v482
  %v503 = vadd.f32 %v439, %v484
  %v504 = vadd.f32 %v440, %v486
  %v505 = vadd.f32 %v441, %v488
  %v506 = vadd.f32 %v442, %v490
  %507 = vst [vmem:[#allocation2] sm:$0xff] %v347
  %508 = vst [vmem:[#allocation2 + $0x8] sm:$0xff] %v348
  %509 = vst [vmem:[#allocation2 + $0x10] sm:$0xff] %v349
  %510 = vst [vmem:[#allocation2 + $0x18] sm:$0xff] %v350
  %511 = vst [vmem:[#allocation2 + $0x20] sm:$0xff] %v351
  %512 = vst [vmem:[#allocation2 + $0x28] sm:$0xff] %v352
  %513 = vst [vmem:[#allocation2 + $0x30] sm:$0xff] %v353
  %514 = vst [vmem:[#allocation2 + $0x38] sm:$0xff] %v354
  %515 = vst [vmem:[#allocation2 + $0x40] sm:$0xff] %v355
  %516 = vst [vmem:[#allocation2 + $0x48] sm:$0xff] %v356
  %517 = vst [vmem:[#allocation2 + $0x50] sm:$0xff] %v357
  %518 = vst [vmem:[#allocation2 + $0x58] sm:$0xff] %v358
  %519 = vst [vmem:[#allocation2 + $0x60] sm:$0xff] %v359
  %520 = vst [vmem:[#allocation2 + $0x68] sm:$0xff] %v360
  %521 = vst [vmem:[#allocation2 + $0x70] sm:$0xff] %v361
  %522 = vst [vmem:[#allocation2 + $0x78] sm:$0xff] %v362
  %523 = vst [vmem:[#allocation3] sm:$0xff] %v491
  %524 = vst [vmem:[#allocation3 + $0x8] sm:$0xff] %v492
  %525 = vst [vmem:[#allocation3 + $0x10] sm:$0xff] %v493
  %526 = vst [vmem:[#allocation3 + $0x18] sm:$0xff] %v494
  %527 = vst [vmem:[#allocation3 + $0x20] sm:$0xff] %v495
  %528 = vst [vmem:[#allocation3 + $0x28] sm:$0xff] %v496
  %529 = vst [vmem:[#allocation3 + $0x30] sm:$0xff] %v497
  %530 = vst [vmem:[#allocation3 + $0x38] sm:$0xff] %v498
  %531 = vst [vmem:[#allocation3 + $0x40] sm:$0xff] %v499
  %532 = vst [vmem:[#allocation3 + $0x48] sm:$0xff] %v500
  %533 = vst [vmem:[#allocation3 + $0x50] sm:$0xff] %v501
  %534 = vst [vmem:[#allocation3 + $0x58] sm:$0xff] %v502
  %535 = vst [vmem:[#allocation3 + $0x60] sm:$0xff] %v503
  %536 = vst [vmem:[#allocation3 + $0x68] sm:$0xff] %v504
  %537 = vst [vmem:[#allocation3 + $0x70] sm:$0xff] %v505
  %538 = vst [vmem:[#allocation3 + $0x78] sm:$0xff] %v506
  // Predicated region
  $region18: #{_lambda_.1} parent=0 // pred_check
    %p539 = pneg %p14
  $region19: #{_lambda_.1} parent=0 // pred_check_branch
    %541 = sbr.rel (%p539) target = $region21
  $region20: #{_lambda_.1} parent=0 // pred_region
    %v542 = vld [vmem:[#allocation2] sm:$0xff]
    %v543 = vld [vmem:[#allocation2 + $0x8] sm:$0xff]
    %v544 = vld [vmem:[#allocation2 + $0x10] sm:$0xff]
    %v545 = vld [vmem:[#allocation2 + $0x18] sm:$0xff]
    %v546 = vld [vmem:[#allocation2 + $0x20] sm:$0xff]
    %v547 = vld [vmem:[#allocation2 + $0x28] sm:$0xff]
    %v548 = vld [vmem:[#allocation2 + $0x30] sm:$0xff]
    %v549 = vld [vmem:[#allocation2 + $0x38] sm:$0xff]
    %v550 = vld [vmem:[#allocation2 + $0x40] sm:$0xff]
    %v551 = vld [vmem:[#allocation2 + $0x48] sm:$0xff]
    %v552 = vld [vmem:[#allocation2 + $0x50] sm:$0xff]
    %v553 = vld [vmem:[#allocation2 + $0x58] sm:$0xff]
    %v554 = vld [vmem:[#allocation2 + $0x60] sm:$0xff]
    %v555 = vld [vmem:[#allocation2 + $0x68] sm:$0xff]
    %v556 = vld [vmem:[#allocation2 + $0x70] sm:$0xff]
    %v557 = vld [vmem:[#allocation2 + $0x78] sm:$0xff]
    %558 = vmax.xlane.f32.xlu0 %v542
    %v559 = vpop.xlane.xlu0 %558
    %560 = vmax.xlane.f32.xlu0 %v543
    %v561 = vpop.xlane.xlu0 %560
    %562 = vmax.xlane.f32.xlu0 %v544
    %v563 = vpop.xlane.xlu0 %562
    %564 = vmax.xlane.f32.xlu0 %v545
    %v565 = vpop.xlane.xlu0 %564
    %566 = vmax.xlane.f32.xlu0 %v546
    %v567 = vpop.xlane.xlu0 %566
    %568 = vmax.xlane.f32.xlu0 %v547
    %v569 = vpop.xlane.xlu0 %568
    %570 = vmax.xlane.f32.xlu0 %v548
    %v571 = vpop.xlane.xlu0 %570
    %572 = vmax.xlane.f32.xlu0 %v549
    %v573 = vpop.xlane.xlu0 %572
    %574 = vmax.xlane.f32.xlu0 %v550
    %v575 = vpop.xlane.xlu0 %574
    %576 = vmax.xlane.f32.xlu0 %v551
    %v577 = vpop.xlane.xlu0 %576
    %578 = vmax.xlane.f32.xlu0 %v552
    %v579 = vpop.xlane.xlu0 %578
    %580 = vmax.xlane.f32.xlu0 %v553
    %v581 = vpop.xlane.xlu0 %580
    %582 = vmax.xlane.f32.xlu0 %v554
    %v583 = vpop.xlane.xlu0 %582
    %584 = vmax.xlane.f32.xlu0 %v555
    %v585 = vpop.xlane.xlu0 %584
    %586 = vmax.xlane.f32.xlu0 %v556
    %v587 = vpop.xlane.xlu0 %586
    %588 = vmax.xlane.f32.xlu0 %v557
    %v589 = vpop.xlane.xlu0 %588
    %v590 = vsub.f32 %v542, %v559
    %v591 = vsub.f32 %v543, %v561
    %v592 = vsub.f32 %v544, %v563
    %v593 = vsub.f32 %v545, %v565
    %v594 = vsub.f32 %v546, %v567
    %v595 = vsub.f32 %v547, %v569
    %v596 = vsub.f32 %v548, %v571
    %v597 = vsub.f32 %v549, %v573
    %v598 = vsub.f32 %v550, %v575
    %v599 = vsub.f32 %v551, %v577
    %v600 = vsub.f32 %v552, %v579
    %v601 = vsub.f32 %v553, %v581
    %v602 = vsub.f32 %v554, %v583
    %v603 = vsub.f32 %v555, %v585
    %v604 = vsub.f32 %v556, %v587
    %v605 = vsub.f32 %v557, %v589
    %v606 = vmul.f32 %v590, 1.442695
    %v607 = vpow.pop %v606
    %v608 = vmul.f32 %v591, 1.442695
    %v609 = vpow.pop %v608
    %v610 = vmul.f32 %v592, 1.442695
    %v611 = vpow.pop %v610
    %v612 = vmul.f32 %v593, 1.442695
    %v613 = vpow.pop %v612
    %v614 = vmul.f32 %v594, 1.442695
    %v615 = vpow.pop %v614
    %v616 = vmul.f32 %v595, 1.442695
    %v617 = vpow.pop %v616
    %v618 = vmul.f32 %v596, 1.442695
    %v619 = vpow.pop %v618
    %v620 = vmul.f32 %v597, 1.442695
    %v621 = vpow.pop %v620
    %v622 = vmul.f32 %v598, 1.442695
    %v623 = vpow.pop %v622
    %v624 = vmul.f32 %v599, 1.442695
    %v625 = vpow.pop %v624
    %v626 = vmul.f32 %v600, 1.442695
    %v627 = vpow.pop %v626
    %v628 = vmul.f32 %v601, 1.442695
    %v629 = vpow.pop %v628
    %v630 = vmul.f32 %v602, 1.442695
    %v631 = vpow.pop %v630
    %v632 = vmul.f32 %v603, 1.442695
    %v633 = vpow.pop %v632
    %v634 = vmul.f32 %v604, 1.442695
    %v635 = vpow.pop %v634
    %v636 = vmul.f32 %v605, 1.442695
    %v637 = vpow.pop %v636
    %v638 = vld [vmem:[#allocation3] sm:$0xff]
    %v639 = vld [vmem:[#allocation3 + $0x8] sm:$0xff]
    %v640 = vld [vmem:[#allocation3 + $0x10] sm:$0xff]
    %v641 = vld [vmem:[#allocation3 + $0x18] sm:$0xff]
    %v642 = vld [vmem:[#allocation3 + $0x20] sm:$0xff]
    %v643 = vld [vmem:[#allocation3 + $0x28] sm:$0xff]
    %v644 = vld [vmem:[#allocation3 + $0x30] sm:$0xff]
    %v645 = vld [vmem:[#allocation3 + $0x38] sm:$0xff]
    %v646 = vld [vmem:[#allocation3 + $0x40] sm:$0xff]
    %v647 = vld [vmem:[#allocation3 + $0x48] sm:$0xff]
    %v648 = vld [vmem:[#allocation3 + $0x50] sm:$0xff]
    %v649 = vld [vmem:[#allocation3 + $0x58] sm:$0xff]
    %v650 = vld [vmem:[#allocation3 + $0x60] sm:$0xff]
    %v651 = vld [vmem:[#allocation3 + $0x68] sm:$0xff]
    %v652 = vld [vmem:[#allocation3 + $0x70] sm:$0xff]
    %v653 = vld [vmem:[#allocation3 + $0x78] sm:$0xff]
    %v654 = vmul.f32 %v607, %v638
    %v655 = vmul.f32 %v609, %v639
    %v656 = vmul.f32 %v611, %v640
    %v657 = vmul.f32 %v613, %v641
    %v658 = vmul.f32 %v615, %v642
    %v659 = vmul.f32 %v617, %v643
    %v660 = vmul.f32 %v619, %v644
    %v661 = vmul.f32 %v621, %v645
    %v662 = vmul.f32 %v623, %v646
    %v663 = vmul.f32 %v625, %v647
    %v664 = vmul.f32 %v627, %v648
    %v665 = vmul.f32 %v629, %v649
    %v666 = vmul.f32 %v631, %v650
    %v667 = vmul.f32 %v633, %v651
    %v668 = vmul.f32 %v635, %v652
    %v669 = vmul.f32 %v637, %v653
    %670 = vadd.xlane.f32.xlu0 %v654
    %v671 = vpop.xlane.xlu0 %670
    %672 = vadd.xlane.f32.xlu0 %v655
    %v673 = vpop.xlane.xlu0 %672
    %674 = vadd.xlane.f32.xlu0 %v656
    %v675 = vpop.xlane.xlu0 %674
    %676 = vadd.xlane.f32.xlu0 %v657
    %v677 = vpop.xlane.xlu0 %676
    %678 = vadd.xlane.f32.xlu0 %v658
    %v679 = vpop.xlane.xlu0 %678
    %680 = vadd.xlane.f32.xlu0 %v659
    %v681 = vpop.xlane.xlu0 %680
    %682 = vadd.xlane.f32.xlu0 %v660
    %v683 = vpop.xlane.xlu0 %682
    %684 = vadd.xlane.f32.xlu0 %v661
    %v685 = vpop.xlane.xlu0 %684
    %686 = vadd.xlane.f32.xlu0 %v662
    %v687 = vpop.xlane.xlu0 %686
    %688 = vadd.xlane.f32.xlu0 %v663
    %v689 = vpop.xlane.xlu0 %688
    %690 = vadd.xlane.f32.xlu0 %v664
    %v691 = vpop.xlane.xlu0 %690
    %692 = vadd.xlane.f32.xlu0 %v665
    %v693 = vpop.xlane.xlu0 %692
    %694 = vadd.xlane.f32.xlu0 %v666
    %v695 = vpop.xlane.xlu0 %694
    %696 = vadd.xlane.f32.xlu0 %v667
    %v697 = vpop.xlane.xlu0 %696
    %698 = vadd.xlane.f32.xlu0 %v668
    %v699 = vpop.xlane.xlu0 %698
    %700 = vadd.xlane.f32.xlu0 %v669
    %v701 = vpop.xlane.xlu0 %700
    %v702 = vlog2.pop %v671
    %v703 = vmul.f32 %v702, 0.6931472
    %v704 = vlog2.pop %v673
    %v705 = vmul.f32 %v704, 0.6931472
    %v706 = vlog2.pop %v675
    %v707 = vmul.f32 %v706, 0.6931472
    %v708 = vlog2.pop %v677
    %v709 = vmul.f32 %v708, 0.6931472
    %v710 = vlog2.pop %v679
    %v711 = vmul.f32 %v710, 0.6931472
    %v712 = vlog2.pop %v681
    %v713 = vmul.f32 %v712, 0.6931472
    %v714 = vlog2.pop %v683
    %v715 = vmul.f32 %v714, 0.6931472
    %v716 = vlog2.pop %v685
    %v717 = vmul.f32 %v716, 0.6931472
    %v718 = vlog2.pop %v687
    %v719 = vmul.f32 %v718, 0.6931472
    %v720 = vlog2.pop %v689
    %v721 = vmul.f32 %v720, 0.6931472
    %v722 = vlog2.pop %v691
    %v723 = vmul.f32 %v722, 0.6931472
    %v724 = vlog2.pop %v693
    %v725 = vmul.f32 %v724, 0.6931472
    %v726 = vlog2.pop %v695
    %v727 = vmul.f32 %v726, 0.6931472
    %v728 = vlog2.pop %v697
    %v729 = vmul.f32 %v728, 0.6931472
    %v730 = vlog2.pop %v699
    %v731 = vmul.f32 %v730, 0.6931472
    %v732 = vlog2.pop %v701
    %v733 = vmul.f32 %v732, 0.6931472
    %v734 = vadd.f32 %v559, %v703
    %v735 = vadd.f32 %v561, %v705
    %v736 = vadd.f32 %v563, %v707
    %v737 = vadd.f32 %v565, %v709
    %v738 = vadd.f32 %v567, %v711
    %v739 = vadd.f32 %v569, %v713
    %v740 = vadd.f32 %v571, %v715
    %v741 = vadd.f32 %v573, %v717
    %v742 = vadd.f32 %v575, %v719
    %v743 = vadd.f32 %v577, %v721
    %v744 = vadd.f32 %v579, %v723
    %v745 = vadd.f32 %v581, %v725
    %v746 = vadd.f32 %v583, %v727
    %v747 = vadd.f32 %v585, %v729
    %v748 = vadd.f32 %v587, %v731
    %v749 = vadd.f32 %v589, %v733
    %vm750 = vcmask 7168
    %751 = vst.msk [vmem:[%s3] sm:$0xff] %vm750, %v734
    %752 = vst.msk [vmem:[%s3 + $0x8] sm:$0xff] %vm750, %v735
    %753 = vst.msk [vmem:[%s3 + $0x10] sm:$0xff] %vm750, %v736
    %754 = vst.msk [vmem:[%s3 + $0x18] sm:$0xff] %vm750, %v737
    %755 = vst.msk [vmem:[%s3 + $0x20] sm:$0xff] %vm750, %v738
    %756 = vst.msk [vmem:[%s3 + $0x28] sm:$0xff] %vm750, %v739
    %757 = vst.msk [vmem:[%s3 + $0x30] sm:$0xff] %vm750, %v740
    %758 = vst.msk [vmem:[%s3 + $0x38] sm:$0xff] %vm750, %v741
    %759 = vst.msk [vmem:[%s3 + $0x40] sm:$0xff] %vm750, %v742
    %760 = vst.msk [vmem:[%s3 + $0x48] sm:$0xff] %vm750, %v743
    %761 = vst.msk [vmem:[%s3 + $0x50] sm:$0xff] %vm750, %v744
    %762 = vst.msk [vmem:[%s3 + $0x58] sm:$0xff] %vm750, %v745
    %763 = vst.msk [vmem:[%s3 + $0x60] sm:$0xff] %vm750, %v746
    %764 = vst.msk [vmem:[%s3 + $0x68] sm:$0xff] %vm750, %v747
    %765 = vst.msk [vmem:[%s3 + $0x70] sm:$0xff] %vm750, %v748
    %766 = vst.msk [vmem:[%s3 + $0x78] sm:$0xff] %vm750, %v749
  $region21: #{_lambda_.1} parent=0 // pred_fallthru
    _
  // Predicated region
  $region22: #{_lambda_.1} parent=0 // pred_check
    _
  $region23: #{_lambda_.1} parent=0 // pred_check_branch
    %768 = sbr.rel (0) target = $region25
  $region24: #{_lambda_.1} parent=0 // pred_region
    _
  $region25: #{_lambda_.1} parent=0 // pred_fallthru
    _
  // Predicated region
  $region26: #{_lambda_.1} parent=0 // pred_check
    _
  $region27: #{_lambda_.1} parent=0 // pred_check_branch
    %770 = sbr.rel (0) target = $region29
  $region28: #{_lambda_.1} parent=0 // pred_region
    _
  $region29: #{_lambda_.1} parent=0 // pred_fallthru
    _

</llo_original>
